<compile_context>
chip_gen: v7x
topology: tpu7x:2x2x1
jax: 0.10.0
libtpu: 0.0.40
codegen_flags: <defaults>
</compile_context>

<pallas_src>
import functools

import jax
import jax.numpy as jnp
from jax import lax
from jax.experimental import pallas as pl
from jax.experimental.pallas import tpu as pltpu


# --------------------------------------------------------------------------- #
# Kernel
# --------------------------------------------------------------------------- #
def _additive_attention_kernel(qp_ref,    # (TB, TQ, H)  VMEM f32
                               kpT_ref,   # (TB, H, K)   VMEM f32
                               v_ref,     # (TB, K, Dv)  VMEM f32
                               bias_ref,  # (TB, 1, K)   VMEM f32 additive mask
                               wv_ref,    # (H,)         SMEM f32
                               o_ref,     # (TB, TQ, Dv) VMEM f32
                               *, use_bf16_eup):
    TB, TQ, H = qp_ref.shape
    K = kpT_ref.shape[2]

    qp = qp_ref[...]                      # (TB, TQ, H)
    kpT = kpT_ref[...]                    # (TB, H, K)

    if use_bf16_eup:
        # bf16 transcendentals ~double EUP throughput on v6e/v7x; keep the
        # weighted accumulation and softmax sums in f32.
        def _tanh(x):
            return jnp.tanh(x.astype(jnp.bfloat16)).astype(jnp.float32)

        def _exp(x):
            return jnp.exp(x.astype(jnp.bfloat16)).astype(jnp.float32)
    else:
        _tanh, _exp = jnp.tanh, jnp.exp

    # scores[b,q,k] = sum_h w_v[h] * tanh(qp[b,q,h] + kp[b,k,h]); accumulated
    # over H on lane-dense (TB,TQ,K) tiles — never materializing (TB,TQ,K,H).
    scores = jnp.zeros((TB, TQ, K), jnp.float32)
    if H <= 16:
        # Static unroll: scheduler co-issues the VPU MAC under the EUP tanh.
        for h in range(H):
            qcol = qp[:, :, h:h + 1]      # (TB, TQ, 1) broadcast along lanes
            krow = kpT[:, h:h + 1, :]     # (TB, 1, K)  K contiguous on lanes
            scores = scores + wv_ref[h] * _tanh(qcol + krow)
    else:
        # Large H: moderately unrolled fori_loop avoids code-size / vreg blowup.
        def body(h, acc):
            qcol = lax.dynamic_slice_in_dim(qp, h, 1, axis=2)
            krow = lax.dynamic_slice_in_dim(kpT, h, 1, axis=1)
            return acc + wv_ref[h] * _tanh(qcol + krow)
        scores = lax.fori_loop(0, H, body, scores, unroll=4)

    # Masked softmax: the additive bias (0 for k < valid_len, -1e6 otherwise)
    # is precomputed in the wrapper; masking is one broadcast add per element.
    masked = scores + bias_ref[...]       # (TB,1,K) broadcasts over TQ

    m = jnp.max(masked, axis=-1, keepdims=True)
    e = _exp(masked - m)
    s = jnp.sum(e, axis=-1, keepdims=True)
    attn = e * pl.reciprocal(s, approx=True)   # EUP vrcp: ~free vs VPU divide

    # TODO(synk): nn.Dropout is identity in eval mode; training-mode dropout omitted.

    # torch.bmm(attention_weights, values) -> (TB, TQ, Dv)
    vals = v_ref[...]
    if use_bf16_eup:
        # bf16 MXU matmul is native on all three generations; f32 costs ~3 passes.
        attn = attn.astype(jnp.bfloat16)
        vals = vals.astype(jnp.bfloat16)
    out = jnp.einsum('bqk,bkd->bqd', attn, vals,
                     preferred_element_type=jnp.float32)
    o_ref[...] = out.astype(o_ref.dtype)


# --------------------------------------------------------------------------- #
# Tiling / hardware helpers
# --------------------------------------------------------------------------- #
def _vmem_capacity_bytes():
    try:
        info = pltpu.get_tpu_info()
        cap = getattr(info, "vmem_capacity_bytes", None)
        if cap:
            return int(cap)
    except Exception:
        pass
    return 64 * 1024 * 1024   # v7x per-core floor; safe on every generation


def _default_use_bf16_eup():
    """bf16 EUP/MXU path on v6e/v7x only; v5e has no bf16 VPU/EUP path."""
    try:
        kind = jax.devices()[0].device_kind.lower()
    except Exception:
        return False
    return ("v6" in kind) or ("v7" in kind)


def _derive_tiling(B, Q, K, H, Dv):
    """Generation-aware TB/TQ + explicit scoped-VMEM limit."""
    capacity = _vmem_capacity_bytes()
    TQ = Q if Q <= 256 else 256           # multiple of 8 when Q is tiled

    def tile_bytes(tb, tq):
        blk_in = tb * (tq * H + H * K + K * Dv + K) * 4    # qp, kpT, values, bias
        blk_out = tb * tq * Dv * 4
        pipelined = 2 * (blk_in + blk_out)                  # double-buffered
        temps = 3 * tb * tq * K * 4                         # scores / e / attn
        return pipelined + temps

    budget = int(capacity * 0.45)
    TB = 1
    cand = 1
    while cand <= min(B, 8):
        if B % cand == 0 and tile_bytes(cand, TQ) <= budget:
            TB = cand
        cand += 1

    # v7x has two TensorCores: make sure the "parallel" grid has >= 2 steps
    # whenever the problem allows it (harmless on v5e/v6e).
    q_steps = (Q + TQ - 1) // TQ
    if q_steps == 1 and B >= 2 and B // TB < 2:
        TB = B // 2
        while B % TB:
            TB -= 1

    vmem_limit = int(min(capacity * 0.9,
                         max(32 * 1024 * 1024, 2 * tile_bytes(TB, TQ))))
    return TB, TQ, vmem_limit


# --------------------------------------------------------------------------- #
# Wrapper
# --------------------------------------------------------------------------- #
@functools.partial(jax.jit, static_argnames=("use_bf16_eup",))
def additive_attention(queries, keys, values, valid_lens, w_q, w_k, w_v,
                       *, use_bf16_eup=False):
    """queries (B,Q,Dq), keys (B,K,Dk), values (B,K,Dv), valid_lens (B,) int.
       w_q (Dq,H), w_k (Dk,H), w_v (H,1) -- pre-transposed nn.Linear weights."""
    B, Q, _ = queries.shape
    _, K, _ = keys.shape
    Dv = values.shape[-1]
    H = w_q.shape[1]

    # Linear projections as XLA batched matmuls (full-M MXU tiles); kp is
    # produced pre-transposed so K lands on the lane axis inside the kernel.
    qp = jnp.einsum('bqd,dh->bqh', queries.astype(jnp.float32), w_q,
                    preferred_element_type=jnp.float32)      # (B, Q, H)
    kpT = jnp.einsum('bkd,dh->bhk', keys.astype(jnp.float32), w_k,
                     preferred_element_type=jnp.float32)     # (B, H, K)

    # Additive mask bias precomputed in XLA: {0, -1e6}, matches d2l
    # sequence_mask(value=-1e6) + softmax.
    if valid_lens is None:
        bias = jnp.zeros((B, 1, K), jnp.float32)
    else:
        kidx = jnp.arange(K, dtype=jnp.int32)[None, None, :]
        bias = jnp.where(kidx < valid_lens.astype(jnp.int32)[:, None, None],
                         0.0, -1e6).astype(jnp.float32)      # (B, 1, K)

    wv_row = w_v.reshape(H).astype(jnp.float32)              # (H,) -> SMEM

    TB, TQ, vmem_limit = _derive_tiling(B, Q, K, H, Dv)
    grid = (B // TB, (Q + TQ - 1) // TQ)

    kernel = functools.partial(_additive_attention_kernel,
                               use_bf16_eup=use_bf16_eup)

    return pl.pallas_call(
        kernel,
        out_shape=jax.ShapeDtypeStruct((B, Q, Dv), jnp.float32),
        grid=grid,
        in_specs=[
            pl.BlockSpec((TB, TQ, H), lambda b, q: (b, q, 0)),   # qp
            pl.BlockSpec((TB, H, K), lambda b, q: (b, 0, 0)),    # kpT
            pl.BlockSpec((TB, K, Dv), lambda b, q: (b, 0, 0)),   # values
            pl.BlockSpec((TB, 1, K), lambda b, q: (b, 0, 0)),    # mask bias
            pl.BlockSpec(memory_space=pltpu.MemorySpace.SMEM),   # w_v row
        ],
        out_specs=pl.BlockSpec((TB, TQ, Dv), lambda b, q: (b, q, 0)),
        compiler_params=pltpu.CompilerParams(
            dimension_semantics=("parallel", "parallel"),
            vmem_limit_bytes=vmem_limit),
    )(qp, kpT, values.astype(jnp.float32), bias, wv_row)


# --------------------------------------------------------------------------- #
# Pure-JAX reference (mirrors the PyTorch forward in eval mode)
# --------------------------------------------------------------------------- #
def additive_attention_ref(queries, keys, values, valid_lens, w_q, w_k, w_v):
    qp = queries @ w_q                     # (B,Q,H)
    kp = keys @ w_k                        # (B,K,H)
    feats = jnp.tanh(qp[:, :, None, :] + kp[:, None, :, :])   # (B,Q,K,H)
    scores = (feats @ w_v)[..., 0]                            # (B,Q,K)
    K = scores.shape[-1]
    kidx = jnp.arange(K)[None, None, :]
    mask = kidx < valid_lens[:, None, None]
    masked = jnp.where(mask, scores, -1e6)
    attn = jax.nn.softmax(masked, axis=-1)
    return attn @ values


# --------------------------------------------------------------------------- #
if __name__ == "__main__":
    # Shapes match the d2l example driving this module:
    #   queries (2,1,20), keys (2,10,2), values (2,10,4), num_hiddens=8
    B, Q, K = 2, 1, 10
    query_size, key_size, num_hiddens, Dv = 20, 2, 8, 4

    key = jax.random.PRNGKey(0)
    kq, kwq, kwk, kwv = jax.random.split(key, 4)

    queries = jax.random.normal(kq, (B, Q, query_size), dtype=jnp.float32)
    keys = jnp.ones((B, K, key_size), dtype=jnp.float32)
    values = jnp.tile(
        jnp.arange(K * Dv, dtype=jnp.float32).reshape(1, K, Dv), (B, 1, 1))
    valid_lens = jnp.array([2, 6], dtype=jnp.int32)

    # PyTorch nn.Linear(in, out, bias=False) default: U(-1/sqrt(in), 1/sqrt(in)).
    # Stored pre-transposed: (in, out).
    def linear_init(k, fan_in, fan_out):
        bound = 1.0 / (fan_in ** 0.5)
        return jax.random.uniform(k, (fan_in, fan_out), jnp.float32, -bound, bound)

    w_q = linear_init(kwq, query_size, num_hiddens)   # (Dq, H)
    w_k = linear_init(kwk, key_size, num_hiddens)     # (Dk, H)
    w_v = linear_init(kwv, num_hiddens, 1)            # (H, 1)

    use_bf16 = _default_use_bf16_eup()
    out = additive_attention(queries, keys, values, valid_lens, w_q, w_k, w_v,
                             use_bf16_eup=use_bf16)
    out = jax.block_until_ready(out)

    ref = additive_attention_ref(queries, keys, values, valid_lens, w_q, w_k, w_v)
    assert out.shape == (B, Q, Dv)
    # f32 path: only the approx (EUP) softmax reciprocal differs from the ref.
    # bf16 path (v6e/v7x): bf16 tanh/exp/MXU is numerics-changing -> looser tol.
    if use_bf16:
        ok = jnp.allclose(out, ref, atol=2e-1, rtol=5e-2)
    else:
        ok = jnp.allclose(out, ref, atol=5e-3, rtol=5e-3)
    assert ok, "mismatch vs JAX reference"

    print("KERNEL_OK")
</pallas_src>

<mosaic_0001>
module attributes {stable_mosaic.version = 11 : i64} {
  func.func @_additive_attention_kernel(%arg0: i32, %arg1: i32, %arg2: memref<1x1x8xf32, #tpu.memory_space<vmem>>, %arg3: memref<1x8x10xf32, #tpu.memory_space<vmem>>, %arg4: memref<1x10x4xf32, #tpu.memory_space<vmem>>, %arg5: memref<1x1x10xf32, #tpu.memory_space<vmem>>, %arg6: memref<8xf32, #tpu.memory_space<smem>>, %arg7: memref<1x1x4xf32, #tpu.memory_space<vmem>>) attributes {dimension_semantics = [#tpu.dimension_semantics<parallel>, #tpu.dimension_semantics<parallel>], iteration_bounds = array<i64: 2, 1>, scalar_prefetch = 0 : i64, scratch_operands = 0 : i64, tpu.core_type = #tpu.core_type<tc>, window_params = [{transform_indices = @transform_0, window_bounds = array<i64: 1, 1, 8>}, {transform_indices = @transform_1, window_bounds = array<i64: 1, 8, 10>}, {transform_indices = @transform_2, window_bounds = array<i64: 1, 10, 4>}, {transform_indices = @transform_3, window_bounds = array<i64: 1, 1, 10>}, {transform_indices = @transform_4, window_bounds = array<i64: 8>}, {transform_indices = @transform_5, window_bounds = array<i64: 1, 1, 4>}]} {
    %c0 = arith.constant 0 : index
    %c0_0 = arith.constant 0 : index
    %c0_1 = arith.constant 0 : index
    %0 = vector.load %arg2[%c0, %c0_0, %c0_1] : memref<1x1x8xf32, #tpu.memory_space<vmem>>, vector<1x1x8xf32>
    %c0_2 = arith.constant 0 : index
    %c0_3 = arith.constant 0 : index
    %c0_4 = arith.constant 0 : index
    %1 = vector.load %arg3[%c0_2, %c0_3, %c0_4] : memref<1x8x10xf32, #tpu.memory_space<vmem>>, vector<1x8x10xf32>
    %cst = arith.constant 0.000000e+00 : f32
    %2 = vector.broadcast %cst : f32 to vector<1x1x10xf32>
    %3 = vector.extract_strided_slice %0 {offsets = [0, 0, 0], sizes = [1, 1, 1], strides = [1, 1, 1]} : vector<1x1x8xf32> to vector<1x1x1xf32>
    %4 = vector.extract_strided_slice %1 {offsets = [0, 0, 0], sizes = [1, 1, 10], strides = [1, 1, 1]} : vector<1x8x10xf32> to vector<1x1x10xf32>
    %c0_5 = arith.constant 0 : index
    %5 = memref.load %arg6[%c0_5] : memref<8xf32, #tpu.memory_space<smem>>
    %6 = vector.broadcast %3 : vector<1x1x1xf32> to vector<1x1x10xf32>
    %7 = arith.addf %6, %4 : vector<1x1x10xf32>
    %8 = math.tanh %7 : vector<1x1x10xf32>
    %9 = vector.broadcast %5 : f32 to vector<1x1x10xf32>
    %10 = arith.mulf %9, %8 : vector<1x1x10xf32>
    %11 = arith.addf %2, %10 : vector<1x1x10xf32>
    %12 = vector.extract_strided_slice %0 {offsets = [0, 0, 1], sizes = [1, 1, 1], strides = [1, 1, 1]} : vector<1x1x8xf32> to vector<1x1x1xf32>
    %13 = vector.extract_strided_slice %1 {offsets = [0, 1, 0], sizes = [1, 1, 10], strides = [1, 1, 1]} : vector<1x8x10xf32> to vector<1x1x10xf32>
    %c1 = arith.constant 1 : index
    %14 = memref.load %arg6[%c1] : memref<8xf32, #tpu.memory_space<smem>>
    %15 = vector.broadcast %12 : vector<1x1x1xf32> to vector<1x1x10xf32>
    %16 = arith.addf %15, %13 : vector<1x1x10xf32>
    %17 = math.tanh %16 : vector<1x1x10xf32>
    %18 = vector.broadcast %14 : f32 to vector<1x1x10xf32>
    %19 = arith.mulf %18, %17 : vector<1x1x10xf32>
    %20 = arith.addf %11, %19 : vector<1x1x10xf32>
    %21 = vector.extract_strided_slice %0 {offsets = [0, 0, 2], sizes = [1, 1, 1], strides = [1, 1, 1]} : vector<1x1x8xf32> to vector<1x1x1xf32>
    %22 = vector.extract_strided_slice %1 {offsets = [0, 2, 0], sizes = [1, 1, 10], strides = [1, 1, 1]} : vector<1x8x10xf32> to vector<1x1x10xf32>
    %c2 = arith.constant 2 : index
    %23 = memref.load %arg6[%c2] : memref<8xf32, #tpu.memory_space<smem>>
    %24 = vector.broadcast %21 : vector<1x1x1xf32> to vector<1x1x10xf32>
    %25 = arith.addf %24, %22 : vector<1x1x10xf32>
    %26 = math.tanh %25 : vector<1x1x10xf32>
    %27 = vector.broadcast %23 : f32 to vector<1x1x10xf32>
    %28 = arith.mulf %27, %26 : vector<1x1x10xf32>
    %29 = arith.addf %20, %28 : vector<1x1x10xf32>
    %30 = vector.extract_strided_slice %0 {offsets = [0, 0, 3], sizes = [1, 1, 1], strides = [1, 1, 1]} : vector<1x1x8xf32> to vector<1x1x1xf32>
    %31 = vector.extract_strided_slice %1 {offsets = [0, 3, 0], sizes = [1, 1, 10], strides = [1, 1, 1]} : vector<1x8x10xf32> to vector<1x1x10xf32>
    %c3 = arith.constant 3 : index
    %32 = memref.load %arg6[%c3] : memref<8xf32, #tpu.memory_space<smem>>
    %33 = vector.broadcast %30 : vector<1x1x1xf32> to vector<1x1x10xf32>
    %34 = arith.addf %33, %31 : vector<1x1x10xf32>
    %35 = math.tanh %34 : vector<1x1x10xf32>
    %36 = vector.broadcast %32 : f32 to vector<1x1x10xf32>
    %37 = arith.mulf %36, %35 : vector<1x1x10xf32>
    %38 = arith.addf %29, %37 : vector<1x1x10xf32>
    %39 = vector.extract_strided_slice %0 {offsets = [0, 0, 4], sizes = [1, 1, 1], strides = [1, 1, 1]} : vector<1x1x8xf32> to vector<1x1x1xf32>
    %40 = vector.extract_strided_slice %1 {offsets = [0, 4, 0], sizes = [1, 1, 10], strides = [1, 1, 1]} : vector<1x8x10xf32> to vector<1x1x10xf32>
    %c4 = arith.constant 4 : index
    %41 = memref.load %arg6[%c4] : memref<8xf32, #tpu.memory_space<smem>>
    %42 = vector.broadcast %39 : vector<1x1x1xf32> to vector<1x1x10xf32>
    %43 = arith.addf %42, %40 : vector<1x1x10xf32>
    %44 = math.tanh %43 : vector<1x1x10xf32>
    %45 = vector.broadcast %41 : f32 to vector<1x1x10xf32>
    %46 = arith.mulf %45, %44 : vector<1x1x10xf32>
    %47 = arith.addf %38, %46 : vector<1x1x10xf32>
    %48 = vector.extract_strided_slice %0 {offsets = [0, 0, 5], sizes = [1, 1, 1], strides = [1, 1, 1]} : vector<1x1x8xf32> to vector<1x1x1xf32>
    %49 = vector.extract_strided_slice %1 {offsets = [0, 5, 0], sizes = [1, 1, 10], strides = [1, 1, 1]} : vector<1x8x10xf32> to vector<1x1x10xf32>
    %c5 = arith.constant 5 : index
    %50 = memref.load %arg6[%c5] : memref<8xf32, #tpu.memory_space<smem>>
    %51 = vector.broadcast %48 : vector<1x1x1xf32> to vector<1x1x10xf32>
    %52 = arith.addf %51, %49 : vector<1x1x10xf32>
    %53 = math.tanh %52 : vector<1x1x10xf32>
    %54 = vector.broadcast %50 : f32 to vector<1x1x10xf32>
    %55 = arith.mulf %54, %53 : vector<1x1x10xf32>
    %56 = arith.addf %47, %55 : vector<1x1x10xf32>
    %57 = vector.extract_strided_slice %0 {offsets = [0, 0, 6], sizes = [1, 1, 1], strides = [1, 1, 1]} : vector<1x1x8xf32> to vector<1x1x1xf32>
    %58 = vector.extract_strided_slice %1 {offsets = [0, 6, 0], sizes = [1, 1, 10], strides = [1, 1, 1]} : vector<1x8x10xf32> to vector<1x1x10xf32>
    %c6 = arith.constant 6 : index
    %59 = memref.load %arg6[%c6] : memref<8xf32, #tpu.memory_space<smem>>
    %60 = vector.broadcast %57 : vector<1x1x1xf32> to vector<1x1x10xf32>
    %61 = arith.addf %60, %58 : vector<1x1x10xf32>
    %62 = math.tanh %61 : vector<1x1x10xf32>
    %63 = vector.broadcast %59 : f32 to vector<1x1x10xf32>
    %64 = arith.mulf %63, %62 : vector<1x1x10xf32>
    %65 = arith.addf %56, %64 : vector<1x1x10xf32>
    %66 = vector.extract_strided_slice %0 {offsets = [0, 0, 7], sizes = [1, 1, 1], strides = [1, 1, 1]} : vector<1x1x8xf32> to vector<1x1x1xf32>
    %67 = vector.extract_strided_slice %1 {offsets = [0, 7, 0], sizes = [1, 1, 10], strides = [1, 1, 1]} : vector<1x8x10xf32> to vector<1x1x10xf32>
    %c7 = arith.constant 7 : index
    %68 = memref.load %arg6[%c7] : memref<8xf32, #tpu.memory_space<smem>>
    %69 = vector.broadcast %66 : vector<1x1x1xf32> to vector<1x1x10xf32>
    %70 = arith.addf %69, %67 : vector<1x1x10xf32>
    %71 = math.tanh %70 : vector<1x1x10xf32>
    %72 = vector.broadcast %68 : f32 to vector<1x1x10xf32>
    %73 = arith.mulf %72, %71 : vector<1x1x10xf32>
    %74 = arith.addf %65, %73 : vector<1x1x10xf32>
    %c0_6 = arith.constant 0 : index
    %c0_7 = arith.constant 0 : index
    %c0_8 = arith.constant 0 : index
    %75 = vector.load %arg5[%c0_6, %c0_7, %c0_8] : memref<1x1x10xf32, #tpu.memory_space<vmem>>, vector<1x1x10xf32>
    %76 = arith.addf %74, %75 : vector<1x1x10xf32>
    %cst_9 = arith.constant dense<0xFF800000> : vector<1x1xf32>
    %77 = vector.multi_reduction <maximumf>, %76, %cst_9 [2] : vector<1x1x10xf32> to vector<1x1xf32>
    %78 = vector.shape_cast %77 : vector<1x1xf32> to vector<1x1x1xf32>
    %79 = vector.broadcast %78 : vector<1x1x1xf32> to vector<1x1x10xf32>
    %80 = arith.subf %76, %79 : vector<1x1x10xf32>
    %81 = math.exp %80 : vector<1x1x10xf32>
    %cst_10 = arith.constant dense<0.000000e+00> : vector<1x1xf32>
    %82 = vector.multi_reduction <add>, %81, %cst_10 [2] : vector<1x1x10xf32> to vector<1x1xf32>
    %83 = vector.shape_cast %82 : vector<1x1xf32> to vector<1x1x1xf32>
    %84 = tpu.reciprocal %83 {approx = true} : vector<1x1x1xf32> -> vector<1x1x1xf32>
    %85 = vector.broadcast %84 : vector<1x1x1xf32> to vector<1x1x10xf32>
    %86 = arith.mulf %81, %85 : vector<1x1x10xf32>
    %c0_11 = arith.constant 0 : index
    %c0_12 = arith.constant 0 : index
    %c0_13 = arith.constant 0 : index
    %87 = vector.load %arg4[%c0_11, %c0_12, %c0_13] : memref<1x10x4xf32, #tpu.memory_space<vmem>>, vector<1x10x4xf32>
    "tpu.trace_start"() <{level = 10 : i32, message = "bqk,bkd->bqd"}> : () -> ()
    %cst_14 = arith.constant dense<0.000000e+00> : vector<1x1x4xf32>
    %88 = tpu.matmul %86, %87, %cst_14 {dimension_numbers = #tpu.dot_dimension_numbers<[2], [1], [1], [2], [0, 0, 0, 1, 1, 2], [0], [0]>} : vector<1x1x10xf32>, vector<1x10x4xf32>, vector<1x1x4xf32> -> vector<1x1x4xf32>
    "tpu.trace_stop"() : () -> ()
    %c0_15 = arith.constant 0 : index
    %c0_16 = arith.constant 0 : index
    %c0_17 = arith.constant 0 : index
    %89 = vector.load %arg7[%c0_15, %c0_16, %c0_17] : memref<1x1x4xf32, #tpu.memory_space<vmem>>, vector<1x1x4xf32>
    tpu.vector_store %arg7[%c0_15, %c0_16, %c0_17], %88 {strides = array<i32>} : memref<1x1x4xf32, #tpu.memory_space<vmem>>, vector<1x1x4xf32>,
    return
  }
  func.func @transform_0(%arg0: i32, %arg1: i32) -> (i32, i32, i32) {
    %c0_i32 = arith.constant 0 : i32
    %c0_i32_0 = arith.constant 0 : i32
    return %arg0, %arg1, %c0_i32 : i32, i32, i32
  }
  func.func @transform_1(%arg0: i32, %arg1: i32) -> (i32, i32, i32) {
    %c0_i32 = arith.constant 0 : i32
    %c0_i32_0 = arith.constant 0 : i32
    %c0_i32_1 = arith.constant 0 : i32
    return %arg0, %c0_i32, %c0_i32_0 : i32, i32, i32
  }
  func.func @transform_2(%arg0: i32, %arg1: i32) -> (i32, i32, i32) {
    %c0_i32 = arith.constant 0 : i32
    %c0_i32_0 = arith.constant 0 : i32
    %c0_i32_1 = arith.constant 0 : i32
    return %arg0, %c0_i32, %c0_i32_0 : i32, i32, i32
  }
  func.func @transform_3(%arg0: i32, %arg1: i32) -> (i32, i32, i32) {
    %c0_i32 = arith.constant 0 : i32
    %c0_i32_0 = arith.constant 0 : i32
    %c0_i32_1 = arith.constant 0 : i32
    return %arg0, %c0_i32, %c0_i32_0 : i32, i32, i32
  }
  func.func @transform_4(%arg0: i32, %arg1: i32) -> i32 {
    %c0_i32 = arith.constant 0 : i32
    %c0_i32_0 = arith.constant 0 : i32
    return %c0_i32 : i32
  }
  func.func @transform_5(%arg0: i32, %arg1: i32) -> (i32, i32, i32) {
    %c0_i32 = arith.constant 0 : i32
    %c0_i32_0 = arith.constant 0 : i32
    return %arg0, %arg1, %c0_i32 : i32, i32, i32
  }
}

</mosaic_0001>

<llo_original>
// kernel: additive_attention.1
$region0: #{additive_attention.1}
  #allocation0 [shape = 'u32[]', space=smem, size = 0x4, offset = 0x4, fixed_abs, tag = 'smem constant byte address 0x4 - core index']
  #allocation1 [shape = 'u32[144,128]{1,0:T(1,128)}', space=vmem, size = 0x12000, scoped, tag = 'internal scratch']
  %s0 = inlined_call_operand.vmem [shape: f32[2,1,8], index: 0, kind: input, shape index: {}]
  %s1 = inlined_call_operand.vmem [shape: f32[2,8,10], index: 1, kind: input, shape index: {}]
  %s2 = inlined_call_operand.vmem [shape: f32[2,10,4], index: 2, kind: input, shape index: {}]
  %s3 = inlined_call_operand.vmem [shape: f32[2,1,10], index: 3, kind: input, shape index: {}]
  %s4 = inlined_call_operand.vmem [shape: f32[8], index: 4, kind: input, shape index: {}]
  %s5 = inlined_call_operand.hbm [shape: f32[2,1,4], index: 5, kind: output, shape index: {}]
  %s6 = sld [smem:[#allocation0]]
  $region57: #{additive_attention.1} parent=0
    _
  %s8 = ssub.s32 1, %s6
  %s9 = scalar_select 0, %s8, %s6
  $region1: #{additive_attention.1} parent=0
    #allocation2 [shape = 'u8[512]{0}', space=smem, size = 0x200, scoped, tag = 'input window, operand 4, single buffered']
    #allocation3 [shape = 's32[2]{0}', space=sflag, size = 0x8, scoped, tag = 'scoped memory for additive_attention.1']
    #allocation4 [shape = 's32[2]{0}', space=sflag, size = 0x8, scoped, tag = 'scoped memory for additive_attention.1']
    #allocation5 [shape = 'u8[1024]{0}', space=vmem, size = 0x400, scoped, tag = 'output window, operand 0']
    %10 = vsyncpa [#allocation4], 0
    %11 = vsyncpa [#allocation3], 0
    %s12 = scalar_lea.sflag [#allocation3], 1
    %13 = vsyncpa %s12, 0
    loop: start=0, step=1, limit=4
    $region2: #{additive_attention.1} parent=1 // loop_pre_header
      _
    $region3: #{additive_attention.1} parent=1 // loop_header
      %s15 = sphi 0, %s19
      %p16 = scmp.ge.s32.totalorder %s15, 4
      %s22 = sphi 0, %s34
      %s23 = sphi 0, %s30
      %s24 = sphi 0, %s22
      %s25 = sphi 0, %s23
      %s26 = sphi 0, %s24
      %s27 = sphi 0, %s25
      %s39 = sphi 0, %s41
      %s42 = sphi 0, %s39
      %s43 = sphi 0, %s42
      %s59 = sphi 0, %s43
      %s65 = sphi 0, %s67
      %s68 = sphi 0, %s65
      %s69 = sphi 0, %s68
      %s85 = sphi 0, %s69
      %s91 = sphi 0, %s93
      %s94 = sphi 0, %s91
      %s95 = sphi 0, %s94
      %s111 = sphi 0, %s95
      %s117 = sphi 0, %s119
      %s120 = sphi 0, %s117
      %s121 = sphi 0, %s120
      %s137 = sphi 0, %s121
      %s141 = sphi 0, %s141
      %s143 = sphi 0, %s141
      %s144 = sphi 0, %s143
      %s158 = sphi 0, %s144
      %s166 = sphi 0, %s168
      %s169 = sphi 0, %s166
      %s170 = sphi 0, %s169
      %s186 = sphi 0, %s170
    $region4: #{additive_attention.1} parent=1 // loop_header_branch
      %18 = sbr.rel (%p16) target = $region8
    $region5: #{additive_attention.1} parent=1 // loop_body
      %s20 = ssub.s32 %s15, 1
      %s21 = ssub.s32 %s15, 2
      %s28 = sadd.s32 1, %s23
      %p29 = scmp.ge.s32.totalorder %s28, 1
      %s30 = scalar_select %p29, 0, %s28
      %s31 = sadd.s32 1, %s22
      %s32 = scalar_select %p29, %s31, %s22
      %p33 = scmp.ge.s32.totalorder %s32, 2
      %s34 = scalar_select %p33, 0, %s32
      %s35 = ssub.s32 %s22, %s34
      %s36 = ssub.s32 %s23, %s30
      %s37 = sor.u32 %s35, %s36
      %p38 = scmp.eq.s32.totalorder %s37, 0
      %s40 = sadd.s32 %s39, 1
      %s41 = scalar_select %p38, %s39, %s40
      %p44 = pneg %p38
      %p45 = scmp.eq.s32.totalorder %s15, 1
      %p46 = por %p44, %p45
      %p47 = scmp.ne.s32.totalorder %s39, %s42
      %p48 = scmp.eq.s32.totalorder %s15, 0
      %p49 = por %p47, %p48
      %p50 = scmp.ne.s32.totalorder %s39, %s42
      %p51 = scmp.eq.s32.totalorder %s20, 1
      %p52 = por %p50, %p51
      %p53 = scmp.ne.s32.totalorder %s42, %s43
      %p54 = scmp.eq.s32.totalorder %s20, 0
      %p55 = por %p53, %p54
      %p56 = scmp.ne.s32.totalorder %s42, %s43
      %p57 = scmp.eq.s32.totalorder %s21, 1
      %p58 = por %p56, %p57
      %p60 = scmp.ne.s32.totalorder %s43, %s59
      %p61 = scmp.eq.s32.totalorder %s21, 0
      %p62 = por %p60, %p61
      %s63 = ssub.s32 %s22, %s34
      %p64 = scmp.eq.s32.totalorder %s63, 0
      %s66 = sadd.s32 %s65, 1
      %s67 = scalar_select %p64, %s65, %s66
      %p70 = pneg %p64
      %p71 = scmp.eq.s32.totalorder %s15, 1
      %p72 = por %p70, %p71
      %p73 = scmp.ne.s32.totalorder %s65, %s68
      %p74 = scmp.eq.s32.totalorder %s15, 0
      %p75 = por %p73, %p74
      %p76 = scmp.ne.s32.totalorder %s65, %s68
      %p77 = scmp.eq.s32.totalorder %s20, 1
      %p78 = por %p76, %p77
      %p79 = scmp.ne.s32.totalorder %s68, %s69
      %p80 = scmp.eq.s32.totalorder %s20, 0
      %p81 = por %p79, %p80
      %p82 = scmp.ne.s32.totalorder %s68, %s69
      %p83 = scmp.eq.s32.totalorder %s21, 1
      %p84 = por %p82, %p83
      %p86 = scmp.ne.s32.totalorder %s69, %s85
      %p87 = scmp.eq.s32.totalorder %s21, 0
      %p88 = por %p86, %p87
      %s89 = ssub.s32 %s22, %s34
      %p90 = scmp.eq.s32.totalorder %s89, 0
      %s92 = sadd.s32 %s91, 1
      %s93 = scalar_select %p90, %s91, %s92
      %p96 = pneg %p90
      %p97 = scmp.eq.s32.totalorder %s15, 1
      %p98 = por %p96, %p97
      %p99 = scmp.ne.s32.totalorder %s91, %s94
      %p100 = scmp.eq.s32.totalorder %s15, 0
      %p101 = por %p99, %p100
      %p102 = scmp.ne.s32.totalorder %s91, %s94
      %p103 = scmp.eq.s32.totalorder %s20, 1
      %p104 = por %p102, %p103
      %p105 = scmp.ne.s32.totalorder %s94, %s95
      %p106 = scmp.eq.s32.totalorder %s20, 0
      %p107 = por %p105, %p106
      %p108 = scmp.ne.s32.totalorder %s94, %s95
      %p109 = scmp.eq.s32.totalorder %s21, 1
      %p110 = por %p108, %p109
      %p112 = scmp.ne.s32.totalorder %s95, %s111
      %p113 = scmp.eq.s32.totalorder %s21, 0
      %p114 = por %p112, %p113
      %s115 = ssub.s32 %s22, %s34
      %p116 = scmp.eq.s32.totalorder %s115, 0
      %s118 = sadd.s32 %s117, 1
      %s119 = scalar_select %p116, %s117, %s118
      %p122 = pneg %p116
      %p123 = scmp.eq.s32.totalorder %s15, 1
      %p124 = por %p122, %p123
      %p125 = scmp.ne.s32.totalorder %s117, %s120
      %p126 = scmp.eq.s32.totalorder %s15, 0
      %p127 = por %p125, %p126
      %p128 = scmp.ne.s32.totalorder %s117, %s120
      %p129 = scmp.eq.s32.totalorder %s20, 1
      %p130 = por %p128, %p129
      %p131 = scmp.ne.s32.totalorder %s120, %s121
      %p132 = scmp.eq.s32.totalorder %s20, 0
      %p133 = por %p131, %p132
      %p134 = scmp.ne.s32.totalorder %s120, %s121
      %p135 = scmp.eq.s32.totalorder %s21, 1
      %p136 = por %p134, %p135
      %p138 = scmp.ne.s32.totalorder %s121, %s137
      %p139 = scmp.eq.s32.totalorder %s21, 0
      %p140 = por %p138, %p139
      %s142 = sadd.s32 %s141, 1
      %p145 = scmp.eq.s32.totalorder %s15, 1
      %p146 = scmp.ne.s32.totalorder %s141, %s143
      %p147 = scmp.eq.s32.totalorder %s15, 0
      %p148 = por %p146, %p147
      %p149 = scmp.ne.s32.totalorder %s141, %s143
      %p150 = scmp.eq.s32.totalorder %s20, 1
      %p151 = por %p149, %p150
      %p152 = scmp.ne.s32.totalorder %s143, %s144
      %p153 = scmp.eq.s32.totalorder %s20, 0
      %p154 = por %p152, %p153
      %p155 = scmp.ne.s32.totalorder %s143, %s144
      %p156 = scmp.eq.s32.totalorder %s21, 1
      %p157 = por %p155, %p156
      %p159 = scmp.ne.s32.totalorder %s144, %s158
      %p160 = scmp.eq.s32.totalorder %s21, 0
      %p161 = por %p159, %p160
      %s162 = ssub.s32 %s22, %s34
      %s163 = ssub.s32 %s23, %s30
      %s164 = sor.u32 %s162, %s163
      %p165 = scmp.eq.s32.totalorder %s164, 0
      %s167 = sadd.s32 %s166, 1
      %s168 = scalar_select %p165, %s166, %s167
      %p171 = pneg %p165
      %p172 = scmp.eq.s32.totalorder %s15, 1
      %p173 = por %p171, %p172
      %p174 = scmp.ne.s32.totalorder %s166, %s169
      %p175 = scmp.eq.s32.totalorder %s15, 0
      %p176 = por %p174, %p175
      %p177 = scmp.ne.s32.totalorder %s166, %s169
      %p178 = scmp.eq.s32.totalorder %s20, 1
      %p179 = por %p177, %p178
      %p180 = scmp.ne.s32.totalorder %s169, %s170
      %p181 = scmp.eq.s32.totalorder %s20, 0
      %p182 = por %p180, %p181
      %p183 = scmp.ne.s32.totalorder %s169, %s170
      %p184 = scmp.eq.s32.totalorder %s21, 1
      %p185 = por %p183, %p184
      %p187 = scmp.ne.s32.totalorder %s170, %s186
      %p188 = scmp.eq.s32.totalorder %s21, 0
      %p189 = por %p187, %p188
      %p190 = scmp.le.s32.totalorder 1, %s15
      %p191 = scmp.lt.s32.totalorder %s15, 3
      %p192 = pnand %p190, %p191
      %p193 = pneg %p192
      // Predicated region
      $region9: #{additive_attention.1} parent=5 // pred_check
        _
      $region10: #{additive_attention.1} parent=5 // pred_check_branch
        %195 = sbr.rel (%p192) target = $region12
      $region11: #{additive_attention.1} parent=5 // pred_region
        %s196 = ssub.s32 %s15, 1
        // Predicated region
        $region13: #{additive_attention.1} parent=11 // pred_check
          %p197 = pneg %p154
        $region14: #{additive_attention.1} parent=11 // pred_check_branch
          %199 = sbr.rel (%p197) target = $region16
        $region15: #{additive_attention.1} parent=11 // pred_region
          %s201 = ssub.s32 16, 16
          %202 = vsyncadd [#allocation4], %s201
          %s204 = sshll.u32 %s4, 4
          %s205 = int_to_ptr.vmem [resolvable:$true] %s204
          %207 = dma.vmem_to_smem %s205, 16, [#allocation2], [#allocation4]
        $region16: #{additive_attention.1} parent=11 // pred_fallthru
          _
      $region12: #{additive_attention.1} parent=5 // pred_fallthru
        _
      %p208 = scmp.lt.s32.totalorder %s15, 2
      // Predicated region
      $region17: #{additive_attention.1} parent=5 // pred_check
        %p209 = pneg %p208
      $region18: #{additive_attention.1} parent=5 // pred_check_branch
        %211 = sbr.rel (%p209) target = $region20
      $region19: #{additive_attention.1} parent=5 // pred_region
        // Predicated region
        $region21: #{additive_attention.1} parent=19 // pred_check
          %p212 = pneg %p49
        $region22: #{additive_attention.1} parent=19 // pred_check_branch
          %214 = sbr.rel (%p212) target = $region24
        $region23: #{additive_attention.1} parent=19 // pred_region
          %p215 = scmp.lt.s32.totalorder %s22, 1
          %s216 = scalar_select %p215, %s22, 1
          %p217 = scmp.lt.s32.totalorder %s23, 0
          %s218 = scalar_select %p217, %s23, 0
          %s219 = sadd.s32 %s218, %s216
          %s220 = scalar_lea.vmem %s0, %s219
        $region24: #{additive_attention.1} parent=19 // pred_fallthru
          _
        // Predicated region
        $region25: #{additive_attention.1} parent=19 // pred_check
          %p221 = pneg %p75
        $region26: #{additive_attention.1} parent=19 // pred_check_branch
          %223 = sbr.rel (%p221) target = $region28
        $region27: #{additive_attention.1} parent=19 // pred_region
          %p224 = scmp.lt.s32.totalorder %s22, 1
          %s225 = scalar_select %p224, %s22, 1
          %s226 = smul.addr %s225, 8
          %s227 = scalar_lea.vmem %s1, %s226
        $region28: #{additive_attention.1} parent=19 // pred_fallthru
          _
        // Predicated region
        $region29: #{additive_attention.1} parent=19 // pred_check
          %p228 = pneg %p101
        $region30: #{additive_attention.1} parent=19 // pred_check_branch
          %230 = sbr.rel (%p228) target = $region32
        $region31: #{additive_attention.1} parent=19 // pred_region
          %p231 = scmp.lt.s32.totalorder %s22, 1
          %s232 = scalar_select %p231, %s22, 1
          %s233 = smul.addr %s232, 2
          %s234 = smul.addr %s233, 8
          %s235 = scalar_lea.vmem %s2, %s234
        $region32: #{additive_attention.1} parent=19 // pred_fallthru
          _
        // Predicated region
        $region33: #{additive_attention.1} parent=19 // pred_check
          %p236 = pneg %p127
        $region34: #{additive_attention.1} parent=19 // pred_check_branch
          %238 = sbr.rel (%p236) target = $region36
        $region35: #{additive_attention.1} parent=19 // pred_region
          %p239 = scmp.lt.s32.totalorder %s22, 1
          %s240 = scalar_select %p239, %s22, 1
          %s241 = scalar_lea.vmem %s3, %s240
        $region36: #{additive_attention.1} parent=19 // pred_fallthru
          _
      $region20: #{additive_attention.1} parent=5 // pred_fallthru
        _
      %p242 = scmp.le.s32.totalorder 1, %s15
      %p243 = scmp.lt.s32.totalorder %s15, 3
      %p244 = pnand %p242, %p243
      %p245 = pneg %p244
      // Predicated region
      $region37: #{additive_attention.1} parent=5 // pred_check
        _
      $region38: #{additive_attention.1} parent=5 // pred_check_branch
        %247 = sbr.rel (%p244) target = $region40
      $region39: #{additive_attention.1} parent=5 // pred_region
        %s248 = ssub.s32 %s15, 1
        // Predicated region
        $region41: #{additive_attention.1} parent=39 // pred_check
          %p249 = pneg %p154
        $region42: #{additive_attention.1} parent=39 // pred_check_branch
          %251 = sbr.rel (%p249) target = $region44
        $region43: #{additive_attention.1} parent=39 // pred_region
          %252 = dma.done [#allocation4], 16
        $region44: #{additive_attention.1} parent=39 // pred_fallthru
          _
        %253 = sfence
        %p254 = scmp.lt.s32.totalorder %s24, 1
        %s255 = scalar_select %p254, %s24, 1
        %p256 = scmp.lt.s32.totalorder %s25, 0
        %s257 = scalar_select %p256, %s25, 0
        %s258 = sadd.s32 %s257, %s255
        %s259 = scalar_lea.vmem %s0, %s258
        %p260 = pneg %p55
        %p261 = pneg %p52
        %p262 = scmp.lt.s32.totalorder %s24, 1
        %s263 = scalar_select %p262, %s24, 1
        %s264 = smul.addr %s263, 8
        %s265 = scalar_lea.vmem %s1, %s264
        %p266 = pneg %p81
        %p267 = pneg %p78
        %p268 = scmp.lt.s32.totalorder %s24, 1
        %s269 = scalar_select %p268, %s24, 1
        %s270 = smul.addr %s269, 2
        %s271 = smul.addr %s270, 8
        %s272 = scalar_lea.vmem %s2, %s271
        %p273 = pneg %p107
        %p274 = pneg %p104
        %p275 = scmp.lt.s32.totalorder %s24, 1
        %s276 = scalar_select %p275, %s24, 1
        %s277 = scalar_lea.vmem %s3, %s276
        %p278 = pneg %p133
        %p279 = pneg %p130
        %p280 = pneg %p154
        %p281 = pneg %p151
        %p282 = pneg %p182
        %p283 = pneg %p179
        %s284 = sand.u32 %s169, 1
        %s285 = scalar_lea.sflag [#allocation3], %s284
        %s286 = sand.u32 %s169, 1
        %s287 = scalar_lea.vmem [#allocation5], %s286
        %p288 = scmp.lt.s32.totalorder %s24, 1
        %s289 = scalar_select %p288, %s24, 1
        %p290 = scmp.lt.s32.totalorder %s25, 0
        %s291 = scalar_select %p290, %s25, 0
        %s292 = sadd.s32 %s291, %s289
        %s293 = scalar_lea.vmem %s0, %s292
        %p294 = scmp.lt.s32.totalorder %s24, 1
        %s295 = scalar_select %p294, %s24, 1
        %s296 = smul.addr %s295, 8
        %s297 = scalar_lea.vmem %s1, %s296
        %p298 = scmp.lt.s32.totalorder %s24, 1
        %s299 = scalar_select %p298, %s24, 1
        %s300 = smul.addr %s299, 2
        %s301 = smul.addr %s300, 8
        %s302 = scalar_lea.vmem %s2, %s301
        %p303 = scmp.lt.s32.totalorder %s24, 1
        %s304 = scalar_select %p303, %s24, 1
        %s305 = scalar_lea.vmem %s3, %s304
        %v306 = vld [vmem:[%s293] sm:$0x1]
        %v307 = vld [vmem:[%s297] sm:$0xff]
        %s308 = sld [smem:[#allocation2]]
        %310 = vset.pattern.permute.xlu0 0
        %311 = vperm.xlu0 %310, %v306
        %v312 = vpop.permute.xlu0 %311
        %v314 = vlaneseq
        %v315 = vshrl.u32 %v314, 7
        %v316 = vsub.s32 0, %v315
        %v317 = vrot.slane %v312, %v316
        %v318 = vadd.f32 %v317, %v307
        %v319 = vtanh.pop %v318
        %v320 = vstv %s308
        %v321 = vmul.f32 %v320, %v319
        %v322 = vadd.f32 %v321, 0.0
        %s323 = sld [smem:[#allocation2 + $0x1]]
        %324 = vset.pattern.permute.xlu0 1
        %325 = vperm.xlu0 %324, %v306
        %v326 = vpop.permute.xlu0 %325
        %v328 = vlaneseq
        %v329 = vshrl.u32 %v328, 7
        %v330 = vsub.s32 0, %v329
        %v331 = vrot.slane %v326, %v330
        %v332 = vadd.f32 %v331, %v307
        %v333 = vtanh.pop %v332
        %v334 = vstv %s323
        %v335 = vmul.f32 %v334, %v333
        %v337 = vrot.slane %v335, 1
        %v339 = vadd.f32 %v322, %v337
        %s340 = sld [smem:[#allocation2 + $0x2]]
        %341 = vset.pattern.permute.xlu0 2
        %342 = vperm.xlu0 %341, %v306
        %v343 = vpop.permute.xlu0 %342
        %v345 = vlaneseq
        %v346 = vshrl.u32 %v345, 7
        %v347 = vsub.s32 0, %v346
        %v348 = vrot.slane %v343, %v347
        %v349 = vadd.f32 %v348, %v307
        %v350 = vtanh.pop %v349
        %v351 = vstv %s340
        %v352 = vmul.f32 %v351, %v350
        %v354 = vrot.slane %v352, 2
        %v356 = vadd.f32 %v339, %v354
        %s357 = sld [smem:[#allocation2 + $0x3]]
        %358 = vset.pattern.permute.xlu0 3
        %359 = vperm.xlu0 %358, %v306
        %v360 = vpop.permute.xlu0 %359
        %v362 = vlaneseq
        %v363 = vshrl.u32 %v362, 7
        %v364 = vsub.s32 0, %v363
        %v365 = vrot.slane %v360, %v364
        %v366 = vadd.f32 %v365, %v307
        %v367 = vtanh.pop %v366
        %v368 = vstv %s357
        %v369 = vmul.f32 %v368, %v367
        %v371 = vrot.slane %v369, 3
        %v373 = vadd.f32 %v356, %v371
        %s374 = sld [smem:[#allocation2 + $0x4]]
        %375 = vset.pattern.permute.xlu0 4
        %376 = vperm.xlu0 %375, %v306
        %v377 = vpop.permute.xlu0 %376
        %v379 = vlaneseq
        %v380 = vshrl.u32 %v379, 7
        %v381 = vsub.s32 0, %v380
        %v382 = vrot.slane %v377, %v381
        %v383 = vadd.f32 %v382, %v307
        %v384 = vtanh.pop %v383
        %v385 = vstv %s374
        %v386 = vmul.f32 %v385, %v384
        %v388 = vrot.slane %v386, 4
        %v390 = vadd.f32 %v373, %v388
        %s391 = sld [smem:[#allocation2 + $0x5]]
        %392 = vset.pattern.permute.xlu0 5
        %393 = vperm.xlu0 %392, %v306
        %v394 = vpop.permute.xlu0 %393
        %v396 = vlaneseq
        %v397 = vshrl.u32 %v396, 7
        %v398 = vsub.s32 0, %v397
        %v399 = vrot.slane %v394, %v398
        %v400 = vadd.f32 %v399, %v307
        %v401 = vtanh.pop %v400
        %v402 = vstv %s391
        %v403 = vmul.f32 %v402, %v401
        %v405 = vrot.slane %v403, 5
        %v407 = vadd.f32 %v390, %v405
        %s408 = sld [smem:[#allocation2 + $0x6]]
        %409 = vset.pattern.permute.xlu0 6
        %410 = vperm.xlu0 %409, %v306
        %v411 = vpop.permute.xlu0 %410
        %v413 = vlaneseq
        %v414 = vshrl.u32 %v413, 7
        %v415 = vsub.s32 0, %v414
        %v416 = vrot.slane %v411, %v415
        %v417 = vadd.f32 %v416, %v307
        %v418 = vtanh.pop %v417
        %v419 = vstv %s408
        %v420 = vmul.f32 %v419, %v418
        %v422 = vrot.slane %v420, 6
        %v424 = vadd.f32 %v407, %v422
        %s425 = sld [smem:[#allocation2 + $0x7]]
        %426 = vset.pattern.permute.xlu0 7
        %427 = vperm.xlu0 %426, %v306
        %v428 = vpop.permute.xlu0 %427
        %v430 = vlaneseq
        %v431 = vshrl.u32 %v430, 7
        %v432 = vsub.s32 0, %v431
        %v433 = vrot.slane %v428, %v432
        %v434 = vadd.f32 %v433, %v307
        %v435 = vtanh.pop %v434
        %v436 = vstv %s425
        %v437 = vmul.f32 %v436, %v435
        %v439 = vrot.slane %v437, 7
        %v441 = vadd.f32 %v424, %v439
        %v442 = vld [vmem:[%s305] sm:$0x1]
        %v443 = vadd.f32 %v441, %v442
        %vm444 = vcmask 73728
        %v445 = vsel %vm444, %v443, -inf
        %446 = vmax.xlane.f32.xlu0 %v445
        %v447 = vpop.xlane.xlu0 %446
        %v448 = vsub.f32 %v443, %v447
        %v449 = vmul.f32 %v448, 1.442695
        %v450 = vpow.pop %v449
        %v451 = vsel %vm444, %v450, 0.0
        %452 = vadd.xlane.f32.xlu0 %v451
        %v453 = vpop.xlane.xlu0 %452
        %v454 = vrcp.pop %v453
        %v455 = vmul.f32 %v450, %v454
        %v456 = vld [vmem:[%s302] sm:$0xff]
        %v457 = vld [vmem:[%s302 + $0x8] sm:$0x3]
        %vm458 = vcmask 80896
        %v460 = vsel %vm458, %v455, 0
        %vm462 = vcmask 1041408
        %v464 = vsel %vm462, %v457, 0
        %466 = vmatprep.subr.mxu0 0.0
        %467 = vmatpush1.msra.mxu0 %v456
        %468 = vmatprep.subr.mxu0 0.0
        %469 = vmatpush1.msra.mxu0 %v464
        %470 = vmatprep.subr.mxu0 0.0
        %471 = vmatpush1.msra.mxu0 0.0
        %472 = vmatprep.subr.mxu0 0.0
        %473 = vmatpush1.msra.mxu0 0.0
        %474 = vmatprep.subr.mxu0 0.0
        %475 = vmatpush1.msra.mxu0 0.0
        %476 = vmatprep.subr.mxu0 0.0
        %477 = vmatpush1.msra.mxu0 0.0
        %478 = vmatprep.subr.mxu0 0.0
        %479 = vmatpush1.msra.mxu0 0.0
        %480 = vmatprep.subr.mxu0 0.0
        %481 = vmatpush1.msra.mxu0 0.0
        %482 = vmatprep.subr.mxu0 0.0
        %483 = vmatpush1.msra.mxu0 0.0
        %484 = vmatprep.subr.mxu0 0.0
        %485 = vmatpush1.msra.mxu0 0.0
        %486 = vmatprep.subr.mxu0 0.0
        %487 = vmatpush1.msra.mxu0 0.0
        %488 = vmatprep.subr.mxu0 0.0
        %489 = vmatpush1.msra.mxu0 0.0
        %490 = vmatprep.subr.mxu0 0.0
        %491 = vmatpush1.msra.mxu0 0.0
        %492 = vmatprep.subr.mxu0 0.0
        %493 = vmatpush1.msra.mxu0 0.0
        %494 = vmatprep.subr.mxu0 0.0
        %495 = vmatpush1.msra.mxu0 0.0
        %496 = vmatprep.subr.mxu0 0.0
        %497 = vmatpush1.msra.mxu0 0.0
        %498 = vmatprep.subr.mxu0 0.0
        %499 = vmatpush1.msra.mxu0 0.0
        %500 = vmatprep.subr.mxu0 0.0
        %501 = vmatpush1.msra.mxu0 0.0
        %502 = vmatprep.subr.mxu0 0.0
        %503 = vmatpush1.msra.mxu0 0.0
        %504 = vmatprep.subr.mxu0 0.0
        %505 = vmatpush1.msra.mxu0 0.0
        %506 = vmatprep.subr.mxu0 0.0
        %507 = vmatpush1.msra.mxu0 0.0
        %508 = vmatprep.subr.mxu0 0.0
        %509 = vmatpush1.msra.mxu0 0.0
        %510 = vmatprep.subr.mxu0 0.0
        %511 = vmatpush1.msra.mxu0 0.0
        %512 = vmatprep.subr.mxu0 0.0
        %513 = vmatpush1.msra.mxu0 0.0
        %514 = vmatprep.subr.mxu0 0.0
        %515 = vmatpush1.msra.mxu0 0.0
        %516 = vmatprep.subr.mxu0 0.0
        %517 = vmatpush1.msra.mxu0 0.0
        %518 = vmatprep.subr.mxu0 0.0
        %519 = vmatpush1.msra.mxu0 0.0
        %520 = vmatprep.subr.mxu0 0.0
        %521 = vmatpush1.msra.mxu0 0.0
        %522 = vmatprep.subr.mxu0 0.0
        %523 = vmatpush1.msra.mxu0 0.0
        %524 = vmatprep.subr.mxu0 0.0
        %525 = vmatpush1.msra.mxu0 0.0
        %526 = vmatprep.subr.mxu0 0.0
        %527 = vmatpush1.msra.mxu0 0.0
        %528 = vmatprep.subr.mxu0 0.0
        %529 = vmatpush1.msra.mxu0 0.0
        %530 = vmatprep.mubr.f32.mxu0 0.0
        %531 = vmatmul.mubr.f32.gmra.mrb[0].mxu0 %v460
        %v532 = vpop.f32.mrb[0].mxu0
        %v533 = vadd.f32 0.0, %v532
        %v534 = vpop.f32.mrb[0].mxu0
        %535 = vdwg.mxu0
        %vm536 = vcmask 24576
        %537 = vst.msk [vmem:[%s287] sm:$0x1] %vm536, %v533
        %s538 = sand.u32 %s169, 1
        %s539 = scalar_lea.sflag [#allocation3], %s538
        %s540 = sand.u32 %s169, 1
        %s541 = scalar_lea.vmem [#allocation5], %s540
        // Predicated region
        $region45: #{additive_attention.1} parent=39 // pred_check
          %p542 = pneg %p179
        $region46: #{additive_attention.1} parent=39 // pred_check_branch
          %544 = sbr.rel (%p542) target = $region48
        $region47: #{additive_attention.1} parent=39 // pred_region
          %s546 = ssub.s32 16, 16
          %547 = vsyncadd %s539, %s546
          %s548 = sadd.s32 %s25, %s24
          %s549 = smul.addr %s548, 16
          %s550 = scalar_lea.hbm %s5, %s549
          %s552 = sshll.u32 %s541, 4
          %s553 = int_to_ptr.vmem [resolvable:$true] %s552
          %555 = dma.vmem_to_hbm [thread:$0]  %s553, 16, %s550, %s539
        $region48: #{additive_attention.1} parent=39 // pred_fallthru
          _
      $region40: #{additive_attention.1} parent=5 // pred_fallthru
        _
      %p556 = scmp.le.s32.totalorder 2, %s15
      // Predicated region
      $region49: #{additive_attention.1} parent=5 // pred_check
        %p557 = pneg %p556
      $region50: #{additive_attention.1} parent=5 // pred_check_branch
        %559 = sbr.rel (%p557) target = $region52
      $region51: #{additive_attention.1} parent=5 // pred_region
        %s560 = ssub.s32 %s15, 2
        // Predicated region
        $region53: #{additive_attention.1} parent=51 // pred_check
          %p561 = pneg %p185
        $region54: #{additive_attention.1} parent=51 // pred_check_branch
          %563 = sbr.rel (%p561) target = $region56
        $region55: #{additive_attention.1} parent=51 // pred_region
          %s564 = sand.u32 %s170, 1
          %s565 = scalar_lea.sflag [#allocation3], %s564
          %s566 = sand.u32 %s170, 1
          %s567 = scalar_lea.vmem [#allocation5], %s566
          %568 = dma.done %s565, 16
        $region56: #{additive_attention.1} parent=51 // pred_fallthru
          _
      $region52: #{additive_attention.1} parent=5 // pred_fallthru
        _
    $region6: #{additive_attention.1} parent=1 // loop_footer
      %s19 = sadd.s32 1, %s15
    $region7: #{additive_attention.1} parent=1 // loop_footer_branch
      %14 = sbr.rel target = $region3
    $region8: #{additive_attention.1} parent=1 // loop_exit
      _
    %569 = vsyncpa [#allocation3], 1
    %s570 = scalar_lea.sflag [#allocation3], 1
    %571 = vsyncpa %s570, 1
    %572 = vsyncpa [#allocation4], 1
    %s573 = scalar_lea.sflag [#allocation4], 1
    %574 = vsyncpa %s573, 1

</llo_original>
